<compile_context>
chip_gen: v6e
topology: v6e:2x2x1
jax: 0.10.0
libtpu: 0.0.40
codegen_flags: <defaults>
</compile_context>

<pallas_src>
import math
from functools import partial

import jax
import jax.numpy as jnp
from jax.experimental import pallas as pl
from jax.experimental.pallas import tpu as pltpu


# --------------------------------------------------------------------------- #
# Kernel A: fused QKV projection                                               #
# --------------------------------------------------------------------------- #
def _qkv_proj_kernel(x_ref, w_ref, *out_refs, hd):
    # ONE fused (tn, C) @ (C, 3*H*D) MXU matmul -> [q | k | v] columns.
    qkv = jnp.dot(x_ref[...], w_ref[...], preferred_element_type=jnp.float32)
    q_ref = out_refs[0]
    q_ref[...] = qkv[:, :hd].astype(q_ref.dtype)
    kv = qkv[:, hd:]                      # [k | v] columns (h-major then d)
    for r in out_refs[1:]:                # kv stream (compute dtype) and/or kv cache
        r[...] = kv.astype(r.dtype)


# --------------------------------------------------------------------------- #
# Kernel B: flash-style attention + fused out_proj                             #
# --------------------------------------------------------------------------- #
def _flash_attn_kernel(*refs, n_heads, head_dim, causal, has_pad):
    if has_pad:
        q_ref, kv_ref, wo_ref, keep_ref, o_ref, m_s, l_s, acc_s = refs
    else:
        q_ref, kv_ref, wo_ref, o_ref, m_s, l_s, acc_s = refs
        keep_ref = None

    hd = n_heads * head_dim
    tq = q_ref.shape[0]
    tk = kv_ref.shape[0]
    qi = pl.program_id(1)
    ki = pl.program_id(2)
    nk = pl.num_programs(2)

    @pl.when(ki == 0)
    def _init():
        m_s[...] = jnp.full(m_s.shape, -jnp.inf, m_s.dtype)
        l_s[...] = jnp.zeros(l_s.shape, l_s.dtype)
        acc_s[...] = jnp.zeros(acc_s.shape, acc_s.dtype)

    def _compute():
        if causal:
            # Hoisted: the (tq, tk) mask is built once and reused by every head.
            row = qi * tq + jax.lax.broadcasted_iota(jnp.int32, (tq, tk), 0)
            col = ki * tk + jax.lax.broadcasted_iota(jnp.int32, (tq, tk), 1)
            causal_mask = col > row

        for h in range(n_heads):            # static unroll; n_heads is small
            sl = slice(h * head_dim, (h + 1) * head_dim)
            qh = q_ref[:, sl]                # (tq, D)  (scale already folded in weight)
            kh = kv_ref[:, sl]               # (tk, D)
            vh = kv_ref[:, hd + h * head_dim: hd + (h + 1) * head_dim]   # (tk, D)

            # q @ k^T without transposing k: contract the D axes directly on the MXU.
            # Keep f32 scores (the -1e30 mask fill relies on it).
            s = jax.lax.dot_general(qh, kh, (((1,), (1,)), ((), ())),
                                    preferred_element_type=jnp.float32)  # (tq, tk)
            if causal:
                s = jnp.where(causal_mask, -1e30, s)

            # online softmax (per-head running max / sum, lane-dense f32 accumulator)
            m_prev = m_s[h]
            m_cur = jnp.maximum(m_prev, jnp.max(s, axis=-1, keepdims=True))
            alpha = jnp.exp(m_prev - m_cur)
            p = jnp.exp(s - m_cur)
            l_s[h] = alpha * l_s[h] + jnp.sum(p, axis=-1, keepdims=True)
            acc_s[:, sl] = alpha * acc_s[:, sl] + jnp.dot(
                p.astype(vh.dtype), vh, preferred_element_type=jnp.float32)
            m_s[h] = m_cur

    if causal:
        # Skip tiles entirely above the diagonal (~2x less work for causal attention).
        # Tile ki=0 always holds valid keys, so scratch is never seeded by a skipped tile.
        pl.when(ki * tk <= qi * tq + (tq - 1))(_compute)
    else:
        _compute()

    @pl.when(ki == nk - 1)
    def _finalize():
        # Deferred normalization via EUP reciprocal (off the VALU), per head, then
        # ONE full-depth (tq, HD) @ (HD, C) out_proj matmul (lane-dense store).
        segs = []
        for h in range(n_heads):
            inv = pl.reciprocal(l_s[h], approx=True)                     # (tq, 1)
            segs.append(acc_s[:, h * head_dim:(h + 1) * head_dim] * inv)  # (tq, D)
        o = segs[0] if n_heads == 1 else jnp.concatenate(segs, axis=-1)   # (tq, HD)
        if has_pad:
            # module applies the pad mask to the attention output BEFORE out_proj
            o = o * keep_ref[...]
        o = o.astype(wo_ref.dtype)
        o_ref[...] = jnp.dot(o, wo_ref[...],
                             preferred_element_type=jnp.float32).astype(o_ref.dtype)


# --------------------------------------------------------------------------- #
# Wrapper                                                                      #
# --------------------------------------------------------------------------- #
def _pick_tile(n, max_tile):
    for t in (max_tile, 512, 256, 128, 64, 32, 16, 8):
        if t <= max_tile and n % t == 0:
            return t
    return n  # TODO(synk): fall back loudly for very long prime-ish N (VMEM budget).


def _default_vmem_limit():
    # <= 3/4 of physical VMEM, capped at 64 MiB: 64 MiB on v5e/v6e, 48 MiB on v7x.
    try:
        cap = pltpu.get_tpu_info().vmem_capacity_bytes
        return int(min(64 * 1024 * 1024, (cap * 3) // 4))
    except Exception:
        return 48 * 1024 * 1024


def prepare_attention_weights(w_qkv, w_out, *, n_heads, head_dim, compute_dtype=None):
    """Fuse/regroup the PyTorch-layout weights ONCE (call at weight-load time).

    w_qkv: (3*H*D, C) with rows laid out '(h d qkv)'; w_out: (C, H*D).
    Returns (w_fused (C, 3*H*D) with 1/sqrt(D) folded into the q columns,
             wo (H*D, C)), both in compute_dtype."""
    C = w_qkv.shape[1]
    HD = n_heads * head_dim
    if compute_dtype is None:
        compute_dtype = w_qkv.dtype
    wt = w_qkv.T.reshape(C, n_heads, head_dim, 3)            # (C, H, D, 3)
    scale = 1.0 / math.sqrt(head_dim)
    wq = (wt[..., 0] * scale).reshape(C, HD)                 # softmax scale folded here
    wk = wt[..., 1].reshape(C, HD)
    wv = wt[..., 2].reshape(C, HD)
    w_fused = jnp.concatenate([wq, wk, wv], axis=1).astype(compute_dtype)
    wo = w_out.T.astype(compute_dtype)                       # (HD, C)
    return w_fused, wo


def attention_forward(x, w_qkv=None, w_out=None, *, n_heads, head_dim, causal=False,
                      pad_mask=None, compute_dtype=None,
                      q_tile=512, kv_tile=512,
                      vmem_limit_bytes=None, prepared_weights=None):
    """x: (B, N, C); w_qkv: (3*H*D, C) (PyTorch Linear layout); w_out: (C, H*D).
    Returns (out (B, N, C), kv_to_cache (B, N, 2, H, D))."""
    B, N, C = x.shape
    HD = n_heads * head_dim
    x_dtype = x.dtype
    compute_dtype = jnp.dtype(compute_dtype) if compute_dtype is not None else jnp.dtype(x_dtype)
    separate_cache = compute_dtype != jnp.dtype(x_dtype)

    if vmem_limit_bytes is None:
        vmem_limit_bytes = _default_vmem_limit()

    if prepared_weights is None:
        w_fused, wo = prepare_attention_weights(
            w_qkv, w_out, n_heads=n_heads, head_dim=head_dim, compute_dtype=compute_dtype)
    else:
        w_fused, wo = prepared_weights

    if pad_mask is not None:          # x.masked_fill(pad_mask.unsqueeze(-1), 0)
        x = jnp.where(pad_mask[..., None], 0.0, x)
    xc = x.astype(compute_dtype)

    # ---- kernel A: fused QKV projection -----------------------------------
    tn = _pick_tile(N, 256)
    out_shapes = [jax.ShapeDtypeStruct((B, N, HD), compute_dtype),        # q (stream)
                  jax.ShapeDtypeStruct((B, N, 2 * HD), compute_dtype)]    # kv (stream)
    out_specs = [pl.BlockSpec((None, tn, HD), lambda b, i: (b, i, 0)),
                 pl.BlockSpec((None, tn, 2 * HD), lambda b, i: (b, i, 0))]
    if separate_cache:                                                    # kv cache in x dtype
        out_shapes.append(jax.ShapeDtypeStruct((B, N, 2 * HD), x_dtype))
        out_specs.append(pl.BlockSpec((None, tn, 2 * HD), lambda b, i: (b, i, 0)))

    proj_outs = pl.pallas_call(
        partial(_qkv_proj_kernel, hd=HD),
        out_shape=tuple(out_shapes),
        grid_spec=pltpu.PrefetchScalarGridSpec(
            num_scalar_prefetch=0,
            grid=(B, N // tn),
            in_specs=[pl.BlockSpec((None, tn, C), lambda b, i: (b, i, 0)),
                      pl.BlockSpec((C, 3 * HD), lambda b, i: (0, 0))],
            out_specs=tuple(out_specs)),
        compiler_params=pltpu.CompilerParams(
            dimension_semantics=("parallel", "parallel"),
            vmem_limit_bytes=vmem_limit_bytes),
    )(xc, w_fused)

    q_proj = proj_outs[0]
    kv_stream = proj_outs[1]
    kv_cache = proj_outs[2] if separate_cache else kv_stream

    # ---- kernel B: flash-style attention + fused out_proj -----------------
    tq = _pick_tile(N, q_tile)
    tk = _pick_tile(N, kv_tile)
    has_pad = pad_mask is not None

    in_specs = [pl.BlockSpec((None, tq, HD), lambda b, qi, ki: (b, qi, 0)),
                pl.BlockSpec((None, tk, 2 * HD), lambda b, qi, ki: (b, ki, 0)),
                pl.BlockSpec((HD, C), lambda b, qi, ki: (0, 0))]
    operands = [q_proj, kv_stream, wo]
    if has_pad:
        keep = (~pad_mask).astype(jnp.float32)[..., None]    # (B, N, 1) keep-multiplier
        in_specs.append(pl.BlockSpec((None, tq, 1), lambda b, qi, ki: (b, qi, 0)))
        operands.append(keep)

    out = pl.pallas_call(
        partial(_flash_attn_kernel, n_heads=n_heads, head_dim=head_dim,
                causal=causal, has_pad=has_pad),
        out_shape=jax.ShapeDtypeStruct((B, N, C), x_dtype),
        grid_spec=pltpu.PrefetchScalarGridSpec(
            num_scalar_prefetch=0,
            grid=(B, N // tq, N // tk),
            in_specs=in_specs,
            out_specs=pl.BlockSpec((None, tq, C), lambda b, qi, ki: (b, qi, 0)),
            scratch_shapes=[pltpu.VMEM((n_heads, tq, 1), jnp.float32),   # running max
                            pltpu.VMEM((n_heads, tq, 1), jnp.float32),   # running sum
                            pltpu.VMEM((tq, HD), jnp.float32)]),         # lane-dense acc
        compiler_params=pltpu.CompilerParams(
            dimension_semantics=("parallel", "parallel", "arbitrary"),
            vmem_limit_bytes=vmem_limit_bytes),
    )(*operands)

    # kv_to_cache: (B, N, 2*HD) -> (B, N, 2, H, D) is a free, contiguous reshape.
    kv_to_cache = kv_cache.reshape(B, N, 2, n_heads, head_dim)
    return out, kv_to_cache


# --------------------------------------------------------------------------- #
# Pure-JAX reference (mirrors the PyTorch module's SDPA path)                  #
# --------------------------------------------------------------------------- #
def _reference(x, w_qkv, w_out, n_heads, head_dim, causal=False, pad_mask=None):
    B, N, C = x.shape
    if pad_mask is not None:
        x = jnp.where(pad_mask[..., None], 0.0, x)
    proj = x @ w_qkv.T                                       # (B, N, 3*H*D)
    proj = proj.reshape(B, N, n_heads, head_dim, 3)
    q, k, v = proj[..., 0], proj[..., 1], proj[..., 2]       # (B, N, H, D)
    kv_to_cache = jnp.stack([k, v], axis=2)                  # (B, N, 2, H, D)
    qh = jnp.transpose(q, (0, 2, 1, 3))
    kh = jnp.transpose(k, (0, 2, 1, 3))
    vh = jnp.transpose(v, (0, 2, 1, 3))
    s = jnp.einsum('bhid,bhjd->bhij', qh, kh) / math.sqrt(head_dim)
    if causal:
        mask = jnp.triu(jnp.ones((N, N), bool), 1)
        s = jnp.where(mask, -jnp.inf, s)
    p = jax.nn.softmax(s, axis=-1)
    o = jnp.einsum('bhij,bhjd->bhid', p, vh)
    o = jnp.transpose(o, (0, 2, 1, 3)).reshape(B, N, n_heads * head_dim)
    if pad_mask is not None:
        o = jnp.where(pad_mask[..., None], 0.0, o)
    return o @ w_out.T, kv_to_cache


if __name__ == "__main__":
    B, N, C = 2, 16, 32
    n_heads, head_dim = 4, 8
    HD = n_heads * head_dim

    key = jax.random.PRNGKey(0)
    kx, kw1, kw2 = jax.random.split(key, 3)
    x = jax.random.normal(kx, (B, N, C), dtype=jnp.float32)
    # nn.Linear default init: U(-1/sqrt(in), 1/sqrt(in))
    w_qkv = jax.random.uniform(kw1, (3 * HD, C), jnp.float32,
                               -1.0 / math.sqrt(C), 1.0 / math.sqrt(C))
    w_out = jax.random.uniform(kw2, (C, HD), jnp.float32,
                               -1.0 / math.sqrt(HD), 1.0 / math.sqrt(HD))

    ref_out, ref_kv = _reference(x, w_qkv, w_out, n_heads, head_dim, causal=False)

    # 1) default path (no pad, non-causal, f32)
    out, kv = attention_forward(x, w_qkv, w_out, n_heads=n_heads,
                                head_dim=head_dim, causal=False)
    jax.block_until_ready(out)
    jax.block_until_ready(kv)
    assert out.shape == (B, N, C)
    assert kv.shape == (B, N, 2, n_heads, head_dim)
    assert bool(jnp.allclose(out, ref_out, atol=5e-3, rtol=5e-3))
    assert bool(jnp.allclose(kv, ref_kv, atol=1e-4, rtol=1e-4))

    # 2) causal + pad_mask with small tiles -> multi-tile grid, exercises the
    #    causal tile-skip path and the pre-out_proj pad fix
    pad = jnp.zeros((B, N), bool).at[1, 11:].set(True)
    out2, kv2 = attention_forward(x, w_qkv, w_out, n_heads=n_heads,
                                  head_dim=head_dim, causal=True, pad_mask=pad,
                                  q_tile=8, kv_tile=8)
    jax.block_until_ready(out2)
    ref_out2, ref_kv2 = _reference(x, w_qkv, w_out, n_heads, head_dim,
                                   causal=True, pad_mask=pad)
    assert bool(jnp.allclose(out2, ref_out2, atol=5e-3, rtol=5e-3))
    assert bool(jnp.allclose(kv2, ref_kv2, atol=1e-4, rtol=1e-4))

    # 3) bf16 MXU operands: bf16 kv streamed to kernel B, f32 kv cache output
    out3, kv3 = attention_forward(x, w_qkv, w_out, n_heads=n_heads,
                                  head_dim=head_dim, causal=False,
                                  compute_dtype=jnp.bfloat16)
    jax.block_until_ready(out3)
    assert kv3.dtype == x.dtype
    assert bool(jnp.allclose(out3, ref_out, atol=8e-2, rtol=8e-2))
    assert bool(jnp.allclose(kv3, ref_kv, atol=3e-2, rtol=3e-2))

    # 4) pre-fused weights path (weight prep hoisted out of the per-call path)
    prepped = prepare_attention_weights(w_qkv, w_out, n_heads=n_heads, head_dim=head_dim)
    out4, _ = attention_forward(x, n_heads=n_heads, head_dim=head_dim,
                                prepared_weights=prepped)
    jax.block_until_ready(out4)
    assert bool(jnp.allclose(out4, ref_out, atol=5e-3, rtol=5e-3))

    print("KERNEL_OK")
</pallas_src>

<mosaic_0001>
module attributes {stable_mosaic.version = 11 : i64} {
  func.func @_qkv_proj_kernel(%arg0: i32, %arg1: i32, %arg2: memref<1x16x32xf32, #tpu.memory_space<vmem>>, %arg3: memref<32x96xf32, #tpu.memory_space<vmem>>, %arg4: memref<1x16x32xf32, #tpu.memory_space<vmem>>, %arg5: memref<1x16x64xf32, #tpu.memory_space<vmem>>) attributes {dimension_semantics = [#tpu.dimension_semantics<parallel>, #tpu.dimension_semantics<parallel>], iteration_bounds = array<i64: 2, 1>, scalar_prefetch = 0 : i64, scratch_operands = 0 : i64, tpu.core_type = #tpu.core_type<tc>, window_params = [{transform_indices = @transform_0, window_bounds = array<i64: 1, 16, 32>}, {pipeline_mode = #tpu.pipeline_mode<synchronous>, transform_indices = @transform_1, window_bounds = array<i64: 32, 96>}, {transform_indices = @transform_2, window_bounds = array<i64: 1, 16, 32>}, {transform_indices = @transform_3, window_bounds = array<i64: 1, 16, 64>}]} {
    %c0 = arith.constant 0 : index
    %c0_0 = arith.constant 0 : index
    %c0_1 = arith.constant 0 : index
    %0 = vector.load %arg2[%c0, %c0_0, %c0_1] : memref<1x16x32xf32, #tpu.memory_space<vmem>>, vector<1x16x32xf32>
    %1 = vector.shape_cast %0 : vector<1x16x32xf32> to vector<16x32xf32>
    %c0_2 = arith.constant 0 : index
    %c0_3 = arith.constant 0 : index
    %2 = vector.load %arg3[%c0_2, %c0_3] : memref<32x96xf32, #tpu.memory_space<vmem>>, vector<32x96xf32>
    %cst = arith.constant dense<0.000000e+00> : vector<16x96xf32>
    %3 = tpu.matmul %1, %2, %cst {dimension_numbers = #tpu.dot_dimension_numbers<[1], [0], [0], [1], [0, 0, 1, 1], [], []>} : vector<16x32xf32>, vector<32x96xf32>, vector<16x96xf32> -> vector<16x96xf32>
    %4 = vector.extract_strided_slice %3 {offsets = [0, 0], sizes = [16, 32], strides = [1, 1]} : vector<16x96xf32> to vector<16x32xf32>
    %c0_4 = arith.constant 0 : index
    %c0_5 = arith.constant 0 : index
    %c0_6 = arith.constant 0 : index
    %5 = vector.load %arg4[%c0_4, %c0_5, %c0_6] : memref<1x16x32xf32, #tpu.memory_space<vmem>>, vector<1x16x32xf32>
    %6 = vector.shape_cast %5 : vector<1x16x32xf32> to vector<16x32xf32>
    %7 = vector.shape_cast %4 : vector<16x32xf32> to vector<1x16x32xf32>
    tpu.vector_store %arg4[%c0_4, %c0_5, %c0_6], %7 {strides = array<i32>} : memref<1x16x32xf32, #tpu.memory_space<vmem>>, vector<1x16x32xf32>,
    %8 = vector.extract_strided_slice %3 {offsets = [0, 32], sizes = [16, 64], strides = [1, 1]} : vector<16x96xf32> to vector<16x64xf32>
    %c0_7 = arith.constant 0 : index
    %c0_8 = arith.constant 0 : index
    %c0_9 = arith.constant 0 : index
    %9 = vector.load %arg5[%c0_7, %c0_8, %c0_9] : memref<1x16x64xf32, #tpu.memory_space<vmem>>, vector<1x16x64xf32>
    %10 = vector.shape_cast %9 : vector<1x16x64xf32> to vector<16x64xf32>
    %11 = vector.shape_cast %8 : vector<16x64xf32> to vector<1x16x64xf32>
    tpu.vector_store %arg5[%c0_7, %c0_8, %c0_9], %11 {strides = array<i32>} : memref<1x16x64xf32, #tpu.memory_space<vmem>>, vector<1x16x64xf32>,
    return
  }
  func.func @transform_0(%arg0: i32, %arg1: i32) -> (i32, i32, i32) {
    %c0_i32 = arith.constant 0 : i32
    %c0_i32_0 = arith.constant 0 : i32
    return %arg0, %arg1, %c0_i32 : i32, i32, i32
  }
  func.func @transform_1(%arg0: i32, %arg1: i32) -> (i32, i32) {
    %c0_i32 = arith.constant 0 : i32
    %c0_i32_0 = arith.constant 0 : i32
    %c0_i32_1 = arith.constant 0 : i32
    return %c0_i32, %c0_i32_0 : i32, i32
  }
  func.func @transform_2(%arg0: i32, %arg1: i32) -> (i32, i32, i32) {
    %c0_i32 = arith.constant 0 : i32
    %c0_i32_0 = arith.constant 0 : i32
    return %arg0, %arg1, %c0_i32 : i32, i32, i32
  }
  func.func @transform_3(%arg0: i32, %arg1: i32) -> (i32, i32, i32) {
    %c0_i32 = arith.constant 0 : i32
    %c0_i32_0 = arith.constant 0 : i32
    return %arg0, %arg1, %c0_i32 : i32, i32, i32
  }
}

</mosaic_0001>

<llo_original>
// kernel: tpu_custom_call.1
$region0: #{tpu_custom_call.1}
  #allocation0 [shape = 'u32[]', space=smem, size = 0x4, offset = 0x4, fixed_abs, tag = 'smem constant byte address 0x4 - core index']
  #allocation1 [shape = 'u32[144,128]{1,0:T(1,128)}', space=vmem, size = 0x12000, scoped, tag = 'internal scratch']
  %s0 = inlined_call_operand.hbm [shape: f32[2,16,32], index: 0, kind: input, shape index: {}]
  %s1 = inlined_call_operand.hbm [shape: f32[32,96], index: 1, kind: input, shape index: {}]
  %s2 = inlined_call_operand.hbm [shape: f32[2,16,32], index: 2, kind: output, shape index: {0}]
  %s3 = inlined_call_operand.hbm [shape: f32[2,16,64], index: 3, kind: output, shape index: {1}]
  %4 = xla_tuple %s2, %s3
  %s5 = sld [smem:[#allocation0]]
  $region57: #{tpu_custom_call.1} parent=0
    _
  %s7 = ssub.s32 1, %s5
  %s8 = scalar_select 0, %s7, %s5
  $region1: #{tpu_custom_call.1} parent=0
    #allocation2 [shape = 'u8[16384]{0}', space=vmem, size = 0x4000, scoped, tag = 'input window, operand 0']
    #allocation3 [shape = 's32[2]{0}', space=sflag, size = 0x8, scoped, tag = 'scoped memory for tpu_custom_call.1']
    #allocation4 [shape = 's32[2]{0}', space=sflag, size = 0x8, scoped, tag = 'scoped memory for tpu_custom_call.1']
    #allocation5 [shape = 'u8[16384]{0}', space=vmem, size = 0x4000, scoped, tag = 'input window, operand 1, single buffered']
    #allocation6 [shape = 's32[1]{0}', space=sflag, size = 0x4, scoped, tag = 'scoped memory for tpu_custom_call.1']
    #allocation7 [shape = 'u8[16384]{0}', space=vmem, size = 0x4000, scoped, tag = 'output window, operand 0']
    #allocation8 [shape = 'u8[16384]{0}', space=vmem, size = 0x4000, scoped, tag = 'output window, operand 1']
    #allocation9 [shape = 's32[2]{0}', space=sflag, size = 0x8, scoped, tag = 'scoped memory for tpu_custom_call.1']
    %9 = vsyncpa [#allocation3], 0
    %s10 = scalar_lea.sflag [#allocation3], 1
    %11 = vsyncpa %s10, 0
    %12 = vsyncpa [#allocation6], 0
    %13 = vsyncpa [#allocation4], 0
    %s14 = scalar_lea.sflag [#allocation4], 1
    %15 = vsyncpa %s14, 0
    %16 = vsyncpa [#allocation9], 0
    %s17 = scalar_lea.sflag [#allocation9], 1
    %18 = vsyncpa %s17, 0
    loop: start=0, step=1, limit=4
    $region2: #{tpu_custom_call.1} parent=1 // loop_pre_header
      _
    $region3: #{tpu_custom_call.1} parent=1 // loop_header
      %s20 = sphi 0, %s24
      %p21 = scmp.ge.s32.totalorder %s20, 4
      %s27 = sphi 0, %s39
      %s28 = sphi 0, %s35
      %s29 = sphi 0, %s27
      %s30 = sphi 0, %s28
      %s31 = sphi 0, %s29
      %s32 = sphi 0, %s30
      %s44 = sphi 0, %s46
      %s47 = sphi 0, %s44
      %s48 = sphi 0, %s47
      %s64 = sphi 0, %s48
      %s68 = sphi 0, %s68
      %s70 = sphi 0, %s68
      %s71 = sphi 0, %s70
      %s85 = sphi 0, %s71
      %s93 = sphi 0, %s95
      %s96 = sphi 0, %s93
      %s97 = sphi 0, %s96
      %s113 = sphi 0, %s97
      %s121 = sphi 0, %s123
      %s124 = sphi 0, %s121
      %s125 = sphi 0, %s124
      %s141 = sphi 0, %s125
    $region4: #{tpu_custom_call.1} parent=1 // loop_header_branch
      %23 = sbr.rel (%p21) target = $region8
    $region5: #{tpu_custom_call.1} parent=1 // loop_body
      %s25 = ssub.s32 %s20, 1
      %s26 = ssub.s32 %s20, 2
      %s33 = sadd.s32 1, %s28
      %p34 = scmp.ge.s32.totalorder %s33, 1
      %s35 = scalar_select %p34, 0, %s33
      %s36 = sadd.s32 1, %s27
      %s37 = scalar_select %p34, %s36, %s27
      %p38 = scmp.ge.s32.totalorder %s37, 2
      %s39 = scalar_select %p38, 0, %s37
      %s40 = ssub.s32 %s27, %s39
      %s41 = ssub.s32 %s28, %s35
      %s42 = sor.u32 %s40, %s41
      %p43 = scmp.eq.s32.totalorder %s42, 0
      %s45 = sadd.s32 %s44, 1
      %s46 = scalar_select %p43, %s44, %s45
      %p49 = pneg %p43
      %p50 = scmp.eq.s32.totalorder %s20, 1
      %p51 = por %p49, %p50
      %p52 = scmp.ne.s32.totalorder %s44, %s47
      %p53 = scmp.eq.s32.totalorder %s20, 0
      %p54 = por %p52, %p53
      %p55 = scmp.ne.s32.totalorder %s44, %s47
      %p56 = scmp.eq.s32.totalorder %s25, 1
      %p57 = por %p55, %p56
      %p58 = scmp.ne.s32.totalorder %s47, %s48
      %p59 = scmp.eq.s32.totalorder %s25, 0
      %p60 = por %p58, %p59
      %p61 = scmp.ne.s32.totalorder %s47, %s48
      %p62 = scmp.eq.s32.totalorder %s26, 1
      %p63 = por %p61, %p62
      %p65 = scmp.ne.s32.totalorder %s48, %s64
      %p66 = scmp.eq.s32.totalorder %s26, 0
      %p67 = por %p65, %p66
      %s69 = sadd.s32 %s68, 1
      %p72 = scmp.eq.s32.totalorder %s20, 1
      %p73 = scmp.ne.s32.totalorder %s68, %s70
      %p74 = scmp.eq.s32.totalorder %s20, 0
      %p75 = por %p73, %p74
      %p76 = scmp.ne.s32.totalorder %s68, %s70
      %p77 = scmp.eq.s32.totalorder %s25, 1
      %p78 = por %p76, %p77
      %p79 = scmp.ne.s32.totalorder %s70, %s71
      %p80 = scmp.eq.s32.totalorder %s25, 0
      %p81 = por %p79, %p80
      %p82 = scmp.ne.s32.totalorder %s70, %s71
      %p83 = scmp.eq.s32.totalorder %s26, 1
      %p84 = por %p82, %p83
      %p86 = scmp.ne.s32.totalorder %s71, %s85
      %p87 = scmp.eq.s32.totalorder %s26, 0
      %p88 = por %p86, %p87
      %s89 = ssub.s32 %s27, %s39
      %s90 = ssub.s32 %s28, %s35
      %s91 = sor.u32 %s89, %s90
      %p92 = scmp.eq.s32.totalorder %s91, 0
      %s94 = sadd.s32 %s93, 1
      %s95 = scalar_select %p92, %s93, %s94
      %p98 = pneg %p92
      %p99 = scmp.eq.s32.totalorder %s20, 1
      %p100 = por %p98, %p99
      %p101 = scmp.ne.s32.totalorder %s93, %s96
      %p102 = scmp.eq.s32.totalorder %s20, 0
      %p103 = por %p101, %p102
      %p104 = scmp.ne.s32.totalorder %s93, %s96
      %p105 = scmp.eq.s32.totalorder %s25, 1
      %p106 = por %p104, %p105
      %p107 = scmp.ne.s32.totalorder %s96, %s97
      %p108 = scmp.eq.s32.totalorder %s25, 0
      %p109 = por %p107, %p108
      %p110 = scmp.ne.s32.totalorder %s96, %s97
      %p111 = scmp.eq.s32.totalorder %s26, 1
      %p112 = por %p110, %p111
      %p114 = scmp.ne.s32.totalorder %s97, %s113
      %p115 = scmp.eq.s32.totalorder %s26, 0
      %p116 = por %p114, %p115
      %s117 = ssub.s32 %s27, %s39
      %s118 = ssub.s32 %s28, %s35
      %s119 = sor.u32 %s117, %s118
      %p120 = scmp.eq.s32.totalorder %s119, 0
      %s122 = sadd.s32 %s121, 1
      %s123 = scalar_select %p120, %s121, %s122
      %p126 = pneg %p120
      %p127 = scmp.eq.s32.totalorder %s20, 1
      %p128 = por %p126, %p127
      %p129 = scmp.ne.s32.totalorder %s121, %s124
      %p130 = scmp.eq.s32.totalorder %s20, 0
      %p131 = por %p129, %p130
      %p132 = scmp.ne.s32.totalorder %s121, %s124
      %p133 = scmp.eq.s32.totalorder %s25, 1
      %p134 = por %p132, %p133
      %p135 = scmp.ne.s32.totalorder %s124, %s125
      %p136 = scmp.eq.s32.totalorder %s25, 0
      %p137 = por %p135, %p136
      %p138 = scmp.ne.s32.totalorder %s124, %s125
      %p139 = scmp.eq.s32.totalorder %s26, 1
      %p140 = por %p138, %p139
      %p142 = scmp.ne.s32.totalorder %s125, %s141
      %p143 = scmp.eq.s32.totalorder %s26, 0
      %p144 = por %p142, %p143
      %p145 = scmp.le.s32.totalorder 1, %s20
      %p146 = scmp.lt.s32.totalorder %s20, 3
      %p147 = pnand %p145, %p146
      %p148 = pneg %p147
      // Predicated region
      $region9: #{tpu_custom_call.1} parent=5 // pred_check
        _
      $region10: #{tpu_custom_call.1} parent=5 // pred_check_branch
        %150 = sbr.rel (%p147) target = $region12
      $region11: #{tpu_custom_call.1} parent=5 // pred_region
        %s151 = ssub.s32 %s20, 1
        // Predicated region
        $region13: #{tpu_custom_call.1} parent=11 // pred_check
          %p152 = pneg %p81
        $region14: #{tpu_custom_call.1} parent=11 // pred_check_branch
          %154 = sbr.rel (%p152) target = $region16
        $region15: #{tpu_custom_call.1} parent=11 // pred_region
          %s156 = ssub.s32 512, 512
          %157 = vsyncadd [#allocation6], %s156
          %s158 = sshll.u32 [#allocation5], 4
          %s159 = int_to_ptr.vmem [resolvable:$true] %s158
          %164 = dma.hbm_to_vmem [thread:$0]  %s1, 512, %s159, [#allocation6], 128, 128, 8
        $region16: #{tpu_custom_call.1} parent=11 // pred_fallthru
          _
      $region12: #{tpu_custom_call.1} parent=5 // pred_fallthru
        _
      %p165 = scmp.lt.s32.totalorder %s20, 2
      // Predicated region
      $region17: #{tpu_custom_call.1} parent=5 // pred_check
        %p166 = pneg %p165
      $region18: #{tpu_custom_call.1} parent=5 // pred_check_branch
        %168 = sbr.rel (%p166) target = $region20
      $region19: #{tpu_custom_call.1} parent=5 // pred_region
        // Predicated region
        $region21: #{tpu_custom_call.1} parent=19 // pred_check
          %p169 = pneg %p54
        $region22: #{tpu_custom_call.1} parent=19 // pred_check_branch
          %171 = sbr.rel (%p169) target = $region24
        $region23: #{tpu_custom_call.1} parent=19 // pred_region
          %s172 = sand.u32 %s44, 1
          %s173 = scalar_lea.sflag [#allocation3], %s172
          %s174 = sand.u32 %s44, 1
          %s175 = smul.addr %s174, 16
          %s176 = scalar_lea.vmem [#allocation2], %s175
          %s177 = smul.u32 2, %s28
          %s179 = ssub.s32 256, 256
          %180 = vsyncadd %s173, %s179
          %s181 = smul.addr %s27, 2
          %s182 = sadd.s32 %s177, %s181
          %s183 = smul.addr %s182, 128
          %s184 = scalar_lea.hbm %s0, %s183
          %s185 = sshll.u32 %s176, 4
          %s186 = int_to_ptr.vmem [resolvable:$true] %s185
          %191 = dma.hbm_to_vmem [thread:$0]  %s184, 256, %s186, %s173, 128, 128, 8
        $region24: #{tpu_custom_call.1} parent=19 // pred_fallthru
          _
      $region20: #{tpu_custom_call.1} parent=5 // pred_fallthru
        _
      %p192 = scmp.le.s32.totalorder 1, %s20
      %p193 = scmp.lt.s32.totalorder %s20, 3
      %p194 = pnand %p192, %p193
      %p195 = pneg %p194
      // Predicated region
      $region25: #{tpu_custom_call.1} parent=5 // pred_check
        _
      $region26: #{tpu_custom_call.1} parent=5 // pred_check_branch
        %197 = sbr.rel (%p194) target = $region28
      $region27: #{tpu_custom_call.1} parent=5 // pred_region
        %s198 = ssub.s32 %s20, 1
        %s199 = sand.u32 %s47, 1
        %s200 = scalar_lea.sflag [#allocation3], %s199
        %s201 = sand.u32 %s47, 1
        %s202 = smul.addr %s201, 16
        %s203 = scalar_lea.vmem [#allocation2], %s202
        // Predicated region
        $region29: #{tpu_custom_call.1} parent=27 // pred_check
          %p204 = pneg %p60
        $region30: #{tpu_custom_call.1} parent=27 // pred_check_branch
          %206 = sbr.rel (%p204) target = $region32
        $region31: #{tpu_custom_call.1} parent=27 // pred_region
          %207 = dma.done %s200, 256
        $region32: #{tpu_custom_call.1} parent=27 // pred_fallthru
          _
        // Predicated region
        $region33: #{tpu_custom_call.1} parent=27 // pred_check
          %p208 = pneg %p81
        $region34: #{tpu_custom_call.1} parent=27 // pred_check_branch
          %210 = sbr.rel (%p208) target = $region36
        $region35: #{tpu_custom_call.1} parent=27 // pred_region
          %211 = dma.done [#allocation6], 512
        $region36: #{tpu_custom_call.1} parent=27 // pred_fallthru
          _
        %s212 = sand.u32 %s47, 1
        %s213 = scalar_lea.sflag [#allocation3], %s212
        %s214 = sand.u32 %s47, 1
        %s215 = smul.addr %s214, 16
        %s216 = scalar_lea.vmem [#allocation2], %s215
        %p217 = pneg %p60
        %p218 = pneg %p57
        %p219 = pneg %p81
        %p220 = pneg %p78
        %p221 = pneg %p109
        %p222 = pneg %p106
        %s223 = sand.u32 %s96, 1
        %s224 = scalar_lea.sflag [#allocation4], %s223
        %s225 = sand.u32 %s96, 1
        %s226 = smul.addr %s225, 16
        %s227 = scalar_lea.vmem [#allocation7], %s226
        %p228 = pneg %p137
        %p229 = pneg %p134
        %s230 = sand.u32 %s124, 1
        %s231 = scalar_lea.sflag [#allocation9], %s230
        %s232 = sand.u32 %s124, 1
        %s233 = smul.addr %s232, 16
        %s234 = scalar_lea.vmem [#allocation8], %s233
        %s235 = smul.u32 2, %s30
        %s236 = smul.u32 2, %s30
        %s237 = smul.u32 2, %s30
        %v238 = vld [vmem:[%s203] sm:$0xff]
        %v239 = vld [vmem:[%s203 + $0x8] sm:$0xff]
        %v240 = vld [vmem:[#allocation5] sm:$0xff]
        %v241 = vld [vmem:[#allocation5 + $0x8] sm:$0xff]
        %v242 = vld [vmem:[#allocation5 + $0x10] sm:$0xff]
        %v243 = vld [vmem:[#allocation5 + $0x18] sm:$0xff]
        %vm244 = vcmask 261120
        %v246 = vsel %vm244, %v238, 0
        %v249 = vsel %vm244, %v239, 0
        %251 = vmatprep.subr.mxu0 0.0
        %252 = vmatpush1.msra.mxu0 0.0
        %253 = vmatprep.subr.mxu0 0.0
        %254 = vmatpush1.msra.mxu0 0.0
        %255 = vmatprep.subr.mxu0 0.0
        %256 = vmatpush1.msra.mxu0 0.0
        %257 = vmatprep.subr.mxu0 0.0
        %258 = vmatpush1.msra.mxu0 0.0
        %259 = vmatprep.subr.mxu0 0.0
        %260 = vmatpush1.msra.mxu0 0.0
        %261 = vmatprep.subr.mxu0 0.0
        %262 = vmatpush1.msra.mxu0 0.0
        %263 = vmatprep.subr.mxu0 0.0
        %264 = vmatpush1.msra.mxu0 0.0
        %265 = vmatprep.subr.mxu0 0.0
        %266 = vmatpush1.msra.mxu0 0.0
        %267 = vmatprep.subr.mxu0 0.0
        %268 = vmatpush1.msra.mxu0 0.0
        %269 = vmatprep.subr.mxu0 0.0
        %270 = vmatpush1.msra.mxu0 0.0
        %271 = vmatprep.subr.mxu0 0.0
        %272 = vmatpush1.msra.mxu0 0.0
        %273 = vmatprep.subr.mxu0 0.0
        %274 = vmatpush1.msra.mxu0 0.0
        %275 = vmatprep.subr.mxu0 0.0
        %276 = vmatpush1.msra.mxu0 %v243
        %277 = vmatprep.subr.mxu0 0.0
        %278 = vmatpush1.msra.mxu0 %v242
        %279 = vmatprep.subr.mxu0 0.0
        %280 = vmatpush1.msra.mxu0 %v241
        %281 = vmatprep.subr.mxu0 0.0
        %282 = vmatpush1.msra.mxu0 %v240
        %283 = vmatprep.subr.mxu0 0.0
        %284 = vmatpush2.msra.mxu0 0.0
        %285 = vmatprep.subr.mxu0 0.0
        %286 = vmatpush2.msra.mxu0 0.0
        %287 = vmatprep.subr.mxu0 0.0
        %288 = vmatpush2.msra.mxu0 0.0
        %289 = vmatprep.subr.mxu0 0.0
        %290 = vmatpush2.msra.mxu0 0.0
        %291 = vmatprep.subr.mxu0 0.0
        %292 = vmatpush2.msra.mxu0 0.0
        %293 = vmatprep.subr.mxu0 0.0
        %294 = vmatpush2.msra.mxu0 0.0
        %295 = vmatprep.subr.mxu0 0.0
        %296 = vmatpush2.msra.mxu0 0.0
        %297 = vmatprep.subr.mxu0 0.0
        %298 = vmatpush2.msra.mxu0 0.0
        %299 = vmatprep.subr.mxu0 0.0
        %300 = vmatpush2.msra.mxu0 0.0
        %301 = vmatprep.subr.mxu0 0.0
        %302 = vmatpush2.msra.mxu0 0.0
        %303 = vmatprep.subr.mxu0 0.0
        %304 = vmatpush2.msra.mxu0 0.0
        %305 = vmatprep.subr.mxu0 0.0
        %306 = vmatpush2.msra.mxu0 0.0
        %307 = vmatprep.subr.mxu0 0.0
        %308 = vmatpush2.msra.mxu0 0.0
        %309 = vmatprep.subr.mxu0 0.0
        %310 = vmatpush2.msra.mxu0 0.0
        %311 = vmatprep.subr.mxu0 0.0
        %312 = vmatpush2.msra.mxu0 0.0
        %313 = vmatprep.subr.mxu0 0.0
        %314 = vmatpush2.msra.mxu0 0.0
        %315 = vmatprep.mubr.f32.mxu0 0.0
        %316 = vmatmul.mubr.f32.gmra.mxu0 %v246
        %v317 = vpop.f32.mrf.mxu0
        %v318 = vadd.f32 0.0, %v317
        %v319 = vpop.f32.mrf.mxu0
        %320 = vmatprep.mubr.f32.mxu0 0.0
        %321 = vmatmul.mubr.f32.gmra.mxu0 %v249
        %v322 = vpop.f32.mrf.mxu0
        %v323 = vadd.f32 0.0, %v322
        %v324 = vpop.f32.mrf.mxu0
        %325 = vdwg.mxu0
        %326 = vst.msk [vmem:[%s227] sm:$0xff] %vm244, %v318
        %327 = vst.msk [vmem:[%s227 + $0x8] sm:$0xff] %vm244, %v323
        %330 = vrot.lane.b32.xlu0 %v318, 96
        %v331 = vpop.permute.xlu0 %330
        %332 = vrot.lane.b32.xlu0 %v323, 96
        %v333 = vpop.permute.xlu0 %332
        %vm336 = vcmask 523264
        %337 = vst.msk [vmem:[%s234] sm:$0xff] %vm336, %v331
        %338 = vst.msk [vmem:[%s234 + $0x8] sm:$0xff] %vm336, %v333
        %s339 = sand.u32 %s96, 1
        %s340 = scalar_lea.sflag [#allocation4], %s339
        %s341 = sand.u32 %s96, 1
        %s342 = smul.addr %s341, 16
        %s343 = scalar_lea.vmem [#allocation7], %s342
        %s344 = sand.u32 %s124, 1
        %s345 = scalar_lea.sflag [#allocation9], %s344
        %s346 = sand.u32 %s124, 1
        %s347 = smul.addr %s346, 16
        %s348 = scalar_lea.vmem [#allocation8], %s347
        // Predicated region
        $region37: #{tpu_custom_call.1} parent=27 // pred_check
          %p349 = pneg %p106
        $region38: #{tpu_custom_call.1} parent=27 // pred_check_branch
          %351 = sbr.rel (%p349) target = $region40
        $region39: #{tpu_custom_call.1} parent=27 // pred_region
          %s352 = smul.u32 2, %s30
          %s354 = ssub.s32 256, 256
          %355 = vsyncadd %s340, %s354
          %s356 = smul.addr %s29, 2
          %s357 = sadd.s32 %s352, %s356
          %s358 = smul.addr %s357, 128
          %s359 = scalar_lea.hbm %s2, %s358
          %s360 = sshll.u32 %s343, 4
          %s361 = int_to_ptr.vmem [resolvable:$true] %s360
          %366 = dma.vmem_to_hbm [thread:$0]  %s361, 256, %s359, %s340, 128, 128, 8
        $region40: #{tpu_custom_call.1} parent=27 // pred_fallthru
          _
        // Predicated region
        $region41: #{tpu_custom_call.1} parent=27 // pred_check
          %p367 = pneg %p134
        $region42: #{tpu_custom_call.1} parent=27 // pred_check_branch
          %369 = sbr.rel (%p367) target = $region44
        $region43: #{tpu_custom_call.1} parent=27 // pred_region
          %s370 = smul.u32 2, %s30
          %s372 = ssub.s32 256, 256
          %373 = vsyncadd %s345, %s372
          %s374 = smul.addr %s29, 2
          %s375 = sadd.s32 %s370, %s374
          %s376 = smul.addr %s375, 128
          %s377 = scalar_lea.hbm %s3, %s376
          %s378 = sshll.u32 %s348, 4
          %s379 = int_to_ptr.vmem [resolvable:$true] %s378
          %384 = dma.vmem_to_hbm [thread:$0]  %s379, 256, %s377, %s345, 128, 128, 8
        $region44: #{tpu_custom_call.1} parent=27 // pred_fallthru
          _
      $region28: #{tpu_custom_call.1} parent=5 // pred_fallthru
        _
      %p385 = scmp.le.s32.totalorder 2, %s20
      // Predicated region
      $region45: #{tpu_custom_call.1} parent=5 // pred_check
        %p386 = pneg %p385
      $region46: #{tpu_custom_call.1} parent=5 // pred_check_branch
        %388 = sbr.rel (%p386) target = $region48
      $region47: #{tpu_custom_call.1} parent=5 // pred_region
        %s389 = ssub.s32 %s20, 2
        // Predicated region
        $region49: #{tpu_custom_call.1} parent=47 // pred_check
          %p390 = pneg %p112
        $region50: #{tpu_custom_call.1} parent=47 // pred_check_branch
          %392 = sbr.rel (%p390) target = $region52
        $region51: #{tpu_custom_call.1} parent=47 // pred_region
          %s393 = sand.u32 %s97, 1
          %s394 = scalar_lea.sflag [#allocation4], %s393
          %s395 = sand.u32 %s97, 1
          %s396 = smul.addr %s395, 16
          %s397 = scalar_lea.vmem [#allocation7], %s396
          %398 = dma.done %s394, 256
        $region52: #{tpu_custom_call.1} parent=47 // pred_fallthru
          _
        // Predicated region
        $region53: #{tpu_custom_call.1} parent=47 // pred_check
          %p399 = pneg %p140
        $region54: #{tpu_custom_call.1} parent=47 // pred_check_branch
          %401 = sbr.rel (%p399) target = $region56
        $region55: #{tpu_custom_call.1} parent=47 // pred_region
          %s402 = sand.u32 %s125, 1
          %s403 = scalar_lea.sflag [#allocation9], %s402
          %s404 = sand.u32 %s125, 1
          %s405 = smul.addr %s404, 16
          %s406 = scalar_lea.vmem [#allocation8], %s405
          %407 = dma.done %s403, 256
        $region56: #{tpu_custom_call.1} parent=47 // pred_fallthru
          _
      $region48: #{tpu_custom_call.1} parent=5 // pred_fallthru
        _
    $region6: #{tpu_custom_call.1} parent=1 // loop_footer
      %s24 = sadd.s32 1, %s20
    $region7: #{tpu_custom_call.1} parent=1 // loop_footer_branch
      %19 = sbr.rel target = $region3
    $region8: #{tpu_custom_call.1} parent=1 // loop_exit
      _
    %408 = vsyncpa [#allocation3], 1
    %s409 = scalar_lea.sflag [#allocation3], 1
    %410 = vsyncpa %s409, 1
    %411 = vsyncpa [#allocation6], 1
    %412 = vsyncpa [#allocation4], 1
    %s413 = scalar_lea.sflag [#allocation4], 1
    %414 = vsyncpa %s413, 1
    %415 = vsyncpa [#allocation9], 1
    %s416 = scalar_lea.sflag [#allocation9], 1
    %417 = vsyncpa %s416, 1

</llo_original>
